<compile_context>
chip_gen: v5e
topology: v5e:2x2
jax: 0.10.0
libtpu: 0.0.40
codegen_flags: <defaults>
</compile_context>

<pallas_src>
import functools
import math
from typing import NamedTuple, Optional

import jax
import jax.numpy as jnp
from jax.experimental import pallas as pl
from jax.experimental.pallas import tpu as pltpu


# ---------------------------------------------------------------------------
# helpers
# ---------------------------------------------------------------------------
def _round_up(x: int, m: int) -> int:
    return ((x + m - 1) // m) * m


def _vmem_capacity_bytes() -> int:
    """Per-generation VMEM capacity (64 MiB on v7x, 128 MiB on v5e/v6e)."""
    try:
        return int(pltpu.get_tpu_info().vmem_capacity_bytes)
    except Exception:  # narrow fallback used only when the query is unavailable
        return 64 * 1024 * 1024  # conservative (v7x) value


def _estimate_vmem_bytes(tm, cin, cmid, cout, x_bytes, w_bytes, out_bytes):
    x_buf = 2 * tm * cin * x_bytes                       # double-buffered x tiles
    o_buf = 2 * tm * cout * out_bytes                    # double-buffered out tiles
    w_buf = 2 * (cin * cmid + cmid * cout) * w_bytes     # weights (assume 2 bufs)
    interm = tm * (cmid + cout) * 4                      # f32 h / y in flight
    interm += tm * (cin + cmid) * w_bytes                # bf16 casts of x / h
    return x_buf + o_buf + w_buf + interm


def _pick_row_tile(n, cin, cmid, cout, x_bytes, w_bytes, out_bytes, budget):
    """Largest row tile (multiple of 8, <= 1024) that fits the VMEM budget."""
    tm = min(1024, _round_up(max(n, 8), 8))
    while tm > 8 and _estimate_vmem_bytes(
            tm, cin, cmid, cout, x_bytes, w_bytes, out_bytes) > budget:
        tm = max(8, _round_up(tm // 2, 8))
    return tm


# ---------------------------------------------------------------------------
# kernel
# ---------------------------------------------------------------------------
def _two_layer_kernel(x_ref, w1t_ref, w2t_ref, o_ref, *, act: bool):
    # x_ref:   (tm, cin)     row tile of the input (true, unpadded width)
    # w1t_ref: (cin, cmid)   W1^T, stationary across the grid
    # w2t_ref: (cmid, cout)  W2^T, stationary across the grid
    # o_ref:   (tm, cout)    output tile (true, unpadded width)
    w_dtype = w1t_ref.dtype
    x = x_ref[...].astype(w_dtype)                     # in-kernel cast (bf16 path)
    h = jnp.dot(x, w1t_ref[...], preferred_element_type=jnp.float32)
    if act:
        h = h * jax.nn.sigmoid(h)                      # swish in f32
    y = jnp.dot(h.astype(w_dtype), w2t_ref[...],
                preferred_element_type=jnp.float32)
    if act:
        y = y * jax.nn.sigmoid(y)
    o_ref[...] = y.astype(o_ref.dtype)


# ---------------------------------------------------------------------------
# parameter preparation (done ONCE, outside the per-call hot path)
# ---------------------------------------------------------------------------
class TwoLayerLinearParams(NamedTuple):
    w1t: jax.Array   # (in, middle)  == W1.T, already in compute dtype
    w2t: jax.Array   # (middle, out) == W2.T, already in compute dtype


def prepare_two_layer_weights(w1, w2,
                              compute_dtype: Optional[jnp.dtype] = jnp.bfloat16
                              ) -> TwoLayerLinearParams:
    """Transpose (and cast to the MXU compute dtype) the torch-layout weights once.

    w1: [middle, in]  (torch Linear weight layout)
    w2: [out, middle]
    compute_dtype: dtype fed to the MXU (bf16 default; None keeps the weight dtype).
    """
    w1 = jnp.asarray(w1)
    w2 = jnp.asarray(w2)
    cmid, cin = w1.shape
    cout, cmid2 = w2.shape
    assert cmid == cmid2, "middle-channel mismatch between lin1 and lin2"
    w1t = w1.T
    w2t = w2.T
    if compute_dtype is not None:
        w1t = w1t.astype(compute_dtype)
        w2t = w2t.astype(compute_dtype)
    return TwoLayerLinearParams(w1t, w2t)


# ---------------------------------------------------------------------------
# wrapper
# ---------------------------------------------------------------------------
def _two_layer_linear_impl(x, params: TwoLayerLinearParams, *, act: bool = False):
    """Pallas implementation of TwoLayerLinear.forward (bias=False)."""
    w1t, w2t = params.w1t, params.w2t
    cin, cmid = w1t.shape
    cmid2, cout = w2t.shape
    assert cmid == cmid2
    assert x.shape[-1] == cin, "input channel mismatch"

    lead_shape = x.shape[:-1]
    x2 = x.reshape(-1, cin)
    n = x2.shape[0]
    out_dtype = x.dtype                                  # output keeps caller dtype

    x_bytes = jnp.dtype(x2.dtype).itemsize
    w_bytes = jnp.dtype(w1t.dtype).itemsize
    out_bytes = jnp.dtype(out_dtype).itemsize

    capacity = _vmem_capacity_bytes()
    budget = capacity // 2                               # tile-selection budget
    vmem_limit = (3 * capacity) // 4                     # scoped VMEM request
    tm = _pick_row_tile(n, cin, cmid, cout, x_bytes, w_bytes, out_bytes, budget)
    # TODO(synk): for extreme channel counts where the full W1^T/W2^T plus a
    # tm=8 row tile exceed VMEM, add K/N grid tiling with an f32 accumulator.

    grid = (pl.cdiv(n, tm),)                             # ragged last block is masked
    kernel = functools.partial(_two_layer_kernel, act=act)

    out = pl.pallas_call(
        kernel,
        out_shape=jax.ShapeDtypeStruct((n, cout), out_dtype),
        grid_spec=pltpu.PrefetchScalarGridSpec(
            num_scalar_prefetch=0,
            grid=grid,
            in_specs=[
                pl.BlockSpec((tm, cin), lambda i: (i, 0)),    # x row tile
                pl.BlockSpec((cin, cmid), lambda i: (0, 0)),  # W1^T (stationary)
                pl.BlockSpec((cmid, cout), lambda i: (0, 0)),  # W2^T (stationary)
            ],
            out_specs=pl.BlockSpec((tm, cout), lambda i: (i, 0)),
        ),
        compiler_params=pltpu.CompilerParams(
            dimension_semantics=("parallel",),
            vmem_limit_bytes=int(vmem_limit),
        ),
    )(x2, w1t, w2t)

    return out.reshape(*lead_shape, cout)


two_layer_linear = jax.jit(_two_layer_linear_impl, static_argnames=("act",))


# ---------------------------------------------------------------------------
# demo / self-check
# ---------------------------------------------------------------------------
def _glorot(key, out_ch, in_ch, dtype=jnp.float32):
    # Matches torch_geometric inits.glorot: U(-a, a), a = sqrt(6/(fan_in+fan_out))
    a = math.sqrt(6.0 / (in_ch + out_ch))
    return jax.random.uniform(key, (out_ch, in_ch), dtype=dtype, minval=-a, maxval=a)


if __name__ == "__main__":
    # Small shapes consistent with TwoLayerLinear(in, middle, out, bias=False).
    # N=100 is deliberately ragged to exercise the cdiv grid / masked last block.
    N, Cin, Cmid, Cout = 100, 32, 64, 32

    key = jax.random.PRNGKey(0)
    kx, k1, k2 = jax.random.split(key, 3)
    x = jax.random.normal(kx, (N, Cin), dtype=jnp.float32)
    w1 = _glorot(k1, Cmid, Cin)   # lin1.weight  [middle, in]
    w2 = _glorot(k2, Cout, Cmid)  # lin2.weight  [out, middle]

    # Weights transposed/cast once, outside the per-call hot path.
    params_bf16 = prepare_two_layer_weights(w1, w2)                       # bf16 MXU path
    params_f32 = prepare_two_layer_weights(w1, w2, compute_dtype=None)    # exact path

    for act in (False, True):
        # Pure-JAX reference of the PyTorch forward.
        ref = x @ w1.T
        if act:
            ref = ref * jax.nn.sigmoid(ref)
        ref = ref @ w2.T
        if act:
            ref = ref * jax.nn.sigmoid(ref)

        out32 = jax.block_until_ready(two_layer_linear(x, params_f32, act=act))
        assert out32.shape == (N, Cout) and out32.dtype == x.dtype
        assert jnp.allclose(out32, ref, atol=2e-5, rtol=2e-5), f"f32 mismatch (act={act})"

        out16 = jax.block_until_ready(two_layer_linear(x, params_bf16, act=act))
        assert out16.shape == (N, Cout) and out16.dtype == x.dtype
        assert jnp.allclose(out16, ref, atol=1e-1, rtol=5e-2), f"bf16 mismatch (act={act})"

    print("KERNEL_OK")
</pallas_src>

<mosaic_0001>
module attributes {stable_mosaic.version = 11 : i64} {
  func.func @_two_layer_kernel(%arg0: i32, %arg1: memref<104x32xf32, #tpu.memory_space<vmem>>, %arg2: memref<32x64xf32, #tpu.memory_space<vmem>>, %arg3: memref<64x32xf32, #tpu.memory_space<vmem>>, %arg4: memref<104x32xf32, #tpu.memory_space<vmem>>) attributes {dimension_semantics = [#tpu.dimension_semantics<parallel>], iteration_bounds = array<i64: 1>, scalar_prefetch = 0 : i64, scratch_operands = 0 : i64, tpu.core_type = #tpu.core_type<tc>, window_params = [{transform_indices = @transform_0, window_bounds = array<i64: 104, 32>}, {pipeline_mode = #tpu.pipeline_mode<synchronous>, transform_indices = @transform_1, window_bounds = array<i64: 32, 64>}, {pipeline_mode = #tpu.pipeline_mode<synchronous>, transform_indices = @transform_2, window_bounds = array<i64: 64, 32>}, {transform_indices = @transform_3, window_bounds = array<i64: 104, 32>}]} {
    %c0 = arith.constant 0 : index
    %c0_0 = arith.constant 0 : index
    %0 = vector.load %arg1[%c0, %c0_0] : memref<104x32xf32, #tpu.memory_space<vmem>>, vector<104x32xf32>
    %c0_1 = arith.constant 0 : index
    %c0_2 = arith.constant 0 : index
    %1 = vector.load %arg2[%c0_1, %c0_2] : memref<32x64xf32, #tpu.memory_space<vmem>>, vector<32x64xf32>
    %cst = arith.constant dense<0.000000e+00> : vector<104x64xf32>
    %2 = tpu.matmul %0, %1, %cst {dimension_numbers = #tpu.dot_dimension_numbers<[1], [0], [0], [1], [0, 0, 1, 1], [], []>} : vector<104x32xf32>, vector<32x64xf32>, vector<104x64xf32> -> vector<104x64xf32>
    %c0_3 = arith.constant 0 : index
    %c0_4 = arith.constant 0 : index
    %3 = vector.load %arg3[%c0_3, %c0_4] : memref<64x32xf32, #tpu.memory_space<vmem>>, vector<64x32xf32>
    %cst_5 = arith.constant dense<0.000000e+00> : vector<104x32xf32>
    %4 = tpu.matmul %2, %3, %cst_5 {dimension_numbers = #tpu.dot_dimension_numbers<[1], [0], [0], [1], [0, 0, 1, 1], [], []>} : vector<104x64xf32>, vector<64x32xf32>, vector<104x32xf32> -> vector<104x32xf32>
    %c0_6 = arith.constant 0 : index
    %c0_7 = arith.constant 0 : index
    %5 = vector.load %arg4[%c0_6, %c0_7] : memref<104x32xf32, #tpu.memory_space<vmem>>, vector<104x32xf32>
    tpu.vector_store %arg4[%c0_6, %c0_7], %4 {strides = array<i32>} : memref<104x32xf32, #tpu.memory_space<vmem>>, vector<104x32xf32>,
    return
  }
  func.func @transform_0(%arg0: i32) -> (i32, i32) {
    %c0_i32 = arith.constant 0 : i32
    %c0_i32_0 = arith.constant 0 : i32
    return %arg0, %c0_i32 : i32, i32
  }
  func.func @transform_1(%arg0: i32) -> (i32, i32) {
    %c0_i32 = arith.constant 0 : i32
    %c0_i32_0 = arith.constant 0 : i32
    %c0_i32_1 = arith.constant 0 : i32
    return %c0_i32, %c0_i32_0 : i32, i32
  }
  func.func @transform_2(%arg0: i32) -> (i32, i32) {
    %c0_i32 = arith.constant 0 : i32
    %c0_i32_0 = arith.constant 0 : i32
    %c0_i32_1 = arith.constant 0 : i32
    return %c0_i32, %c0_i32_0 : i32, i32
  }
  func.func @transform_3(%arg0: i32) -> (i32, i32) {
    %c0_i32 = arith.constant 0 : i32
    %c0_i32_0 = arith.constant 0 : i32
    return %arg0, %c0_i32 : i32, i32
  }
}

</mosaic_0001>

<llo_original>
// kernel: _two_layer_linear_impl.1
$region0: #{_two_layer_linear_impl.1}
  #allocation0 [shape = 'u32[]', space=smem, size = 0x4, offset = 0x4, fixed_abs, tag = 'smem constant byte address 0x4 - core index']
  #allocation1 [shape = 'u32[72,128]{1,0:T(1,128)}', space=vmem, size = 0x9000, scoped, tag = 'internal scratch']
  %s0 = inlined_call_operand.vmem [shape: f32[100,32], index: 0, kind: input, shape index: {}]
  %s1 = inlined_call_operand.vmem [shape: f32[32,64], index: 1, kind: input, shape index: {}]
  %s2 = inlined_call_operand.vmem [shape: f32[64,32], index: 2, kind: input, shape index: {}]
  %s3 = inlined_call_operand.vmem [shape: f32[100,32], index: 3, kind: output, shape index: {}]
  %s4 = sld [smem:[#allocation0]]
  $region22: #{_two_layer_linear_impl.1} parent=0
    _
  %s6 = ssub.s32 1, %s4
  %s7 = scalar_select 0, %s6, %s4
  // Predicated region
  $region2: #{_two_layer_linear_impl.1} parent=0 // pred_check
    _
  $region3: #{_two_layer_linear_impl.1} parent=0 // pred_check_branch
    %9 = sbr.rel (0) target = $region5
  $region4: #{_two_layer_linear_impl.1} parent=0 // pred_region
    _
  $region5: #{_two_layer_linear_impl.1} parent=0 // pred_fallthru
    _
  // Predicated region
  $region6: #{_two_layer_linear_impl.1} parent=0 // pred_check
    _
  $region7: #{_two_layer_linear_impl.1} parent=0 // pred_check_branch
    %11 = sbr.rel (0) target = $region9
  $region8: #{_two_layer_linear_impl.1} parent=0 // pred_region
    _
  $region9: #{_two_layer_linear_impl.1} parent=0 // pred_fallthru
    _
  // Predicated region
  $region10: #{_two_layer_linear_impl.1} parent=0 // pred_check
    _
  $region11: #{_two_layer_linear_impl.1} parent=0 // pred_check_branch
    %13 = sbr.rel (0) target = $region13
  $region12: #{_two_layer_linear_impl.1} parent=0 // pred_region
    _
  $region13: #{_two_layer_linear_impl.1} parent=0 // pred_fallthru
    _
  %v14 = vld [vmem:[%s0] sm:$0xff]
  %v15 = vld [vmem:[%s0 + $0x8] sm:$0xff]
  %v16 = vld [vmem:[%s0 + $0x10] sm:$0xff]
  %v17 = vld [vmem:[%s0 + $0x18] sm:$0xff]
  %v18 = vld [vmem:[%s0 + $0x20] sm:$0xff]
  %v19 = vld [vmem:[%s0 + $0x28] sm:$0xff]
  %v20 = vld [vmem:[%s0 + $0x30] sm:$0xff]
  %v21 = vld [vmem:[%s0 + $0x38] sm:$0xff]
  %v22 = vld [vmem:[%s0 + $0x40] sm:$0xff]
  %v23 = vld [vmem:[%s0 + $0x48] sm:$0xff]
  %v24 = vld [vmem:[%s0 + $0x50] sm:$0xff]
  %v25 = vld [vmem:[%s0 + $0x58] sm:$0xff]
  %v26 = vld [vmem:[%s0 + $0x60] sm:$0xff]
  %v27 = vld [vmem:[%s1] sm:$0xff]
  %v28 = vld [vmem:[%s1 + $0x8] sm:$0xff]
  %v29 = vld [vmem:[%s1 + $0x10] sm:$0xff]
  %v30 = vld [vmem:[%s1 + $0x18] sm:$0xff]
  %vm31 = vcmask 261120
  %v33 = vsel %vm31, %v14, 0
  %v36 = vsel %vm31, %v15, 0
  %v39 = vsel %vm31, %v16, 0
  %v42 = vsel %vm31, %v17, 0
  %v45 = vsel %vm31, %v18, 0
  %v48 = vsel %vm31, %v19, 0
  %v51 = vsel %vm31, %v20, 0
  %v54 = vsel %vm31, %v21, 0
  %v57 = vsel %vm31, %v22, 0
  %v60 = vsel %vm31, %v23, 0
  %v63 = vsel %vm31, %v24, 0
  %v66 = vsel %vm31, %v25, 0
  %v69 = vsel %vm31, %v26, 0
  %71 = vmatpush.msra.mxu0 0.0
  %72 = vmatpush.msra.mxu0 0.0
  %73 = vmatpush.msra.mxu0 0.0
  %74 = vmatpush.msra.mxu0 0.0
  %75 = vmatpush.msra.mxu0 0.0
  %76 = vmatpush.msra.mxu0 0.0
  %77 = vmatpush.msra.mxu0 0.0
  %78 = vmatpush.msra.mxu0 0.0
  %79 = vmatpush.msra.mxu0 0.0
  %80 = vmatpush.msra.mxu0 0.0
  %81 = vmatpush.msra.mxu0 0.0
  %82 = vmatpush.msra.mxu0 0.0
  %83 = vmatpush.msra.mxu0 %v30
  %84 = vmatpush.msra.mxu0 %v29
  %85 = vmatpush.msra.mxu0 %v28
  %86 = vmatpush.msra.mxu0 %v27
  %87 = vmatmul.f32.gmra.mxu0 %v33
  %v88 = vpop.f32.mrf.mxu0
  %v89 = vadd.f32 0.0, %v88
  %90 = vmatmul.f32.gmra.mxu0 %v36
  %v91 = vpop.f32.mrf.mxu0
  %v92 = vadd.f32 0.0, %v91
  %93 = vmatmul.f32.gmra.mxu0 %v39
  %v94 = vpop.f32.mrf.mxu0
  %v95 = vadd.f32 0.0, %v94
  %96 = vmatmul.f32.gmra.mxu0 %v42
  %v97 = vpop.f32.mrf.mxu0
  %v98 = vadd.f32 0.0, %v97
  %99 = vmatmul.f32.gmra.mxu0 %v45
  %v100 = vpop.f32.mrf.mxu0
  %v101 = vadd.f32 0.0, %v100
  %102 = vmatmul.f32.gmra.mxu0 %v48
  %v103 = vpop.f32.mrf.mxu0
  %v104 = vadd.f32 0.0, %v103
  %105 = vmatmul.f32.gmra.mxu0 %v51
  %v106 = vpop.f32.mrf.mxu0
  %v107 = vadd.f32 0.0, %v106
  %108 = vmatmul.f32.gmra.mxu0 %v54
  %v109 = vpop.f32.mrf.mxu0
  %v110 = vadd.f32 0.0, %v109
  %111 = vmatmul.f32.gmra.mxu0 %v57
  %v112 = vpop.f32.mrf.mxu0
  %v113 = vadd.f32 0.0, %v112
  %114 = vmatmul.f32.gmra.mxu0 %v60
  %v115 = vpop.f32.mrf.mxu0
  %v116 = vadd.f32 0.0, %v115
  %117 = vmatmul.f32.gmra.mxu0 %v63
  %v118 = vpop.f32.mrf.mxu0
  %v119 = vadd.f32 0.0, %v118
  %120 = vmatmul.f32.gmra.mxu0 %v66
  %v121 = vpop.f32.mrf.mxu0
  %v122 = vadd.f32 0.0, %v121
  %123 = vmatmul.f32.gmra.mxu0 %v69
  %v124 = vpop.f32.mrf.mxu0
  %v125 = vadd.f32 0.0, %v124
  %126 = vdwg.mxu0
  %v127 = vld [vmem:[%s2] sm:$0xff]
  %v128 = vld [vmem:[%s2 + $0x8] sm:$0xff]
  %v129 = vld [vmem:[%s2 + $0x10] sm:$0xff]
  %v130 = vld [vmem:[%s2 + $0x18] sm:$0xff]
  %v131 = vld [vmem:[%s2 + $0x20] sm:$0xff]
  %v132 = vld [vmem:[%s2 + $0x28] sm:$0xff]
  %v133 = vld [vmem:[%s2 + $0x30] sm:$0xff]
  %v134 = vld [vmem:[%s2 + $0x38] sm:$0xff]
  %vm135 = vcmask 523264
  %v137 = vsel %vm135, %v89, 0
  %v140 = vsel %vm135, %v92, 0
  %v143 = vsel %vm135, %v95, 0
  %v146 = vsel %vm135, %v98, 0
  %v149 = vsel %vm135, %v101, 0
  %v152 = vsel %vm135, %v104, 0
  %v155 = vsel %vm135, %v107, 0
  %v158 = vsel %vm135, %v110, 0
  %v161 = vsel %vm135, %v113, 0
  %v164 = vsel %vm135, %v116, 0
  %v167 = vsel %vm135, %v119, 0
  %v170 = vsel %vm135, %v122, 0
  %v173 = vsel %vm135, %v125, 0
  %175 = vmatpush.msra.mxu0 0.0
  %176 = vmatpush.msra.mxu0 0.0
  %177 = vmatpush.msra.mxu0 0.0
  %178 = vmatpush.msra.mxu0 0.0
  %179 = vmatpush.msra.mxu0 0.0
  %180 = vmatpush.msra.mxu0 0.0
  %181 = vmatpush.msra.mxu0 0.0
  %182 = vmatpush.msra.mxu0 0.0
  %183 = vmatpush.msra.mxu0 %v134
  %184 = vmatpush.msra.mxu0 %v133
  %185 = vmatpush.msra.mxu0 %v132
  %186 = vmatpush.msra.mxu0 %v131
  %187 = vmatpush.msra.mxu0 %v130
  %188 = vmatpush.msra.mxu0 %v129
  %189 = vmatpush.msra.mxu0 %v128
  %190 = vmatpush.msra.mxu0 %v127
  %191 = vmatmul.f32.gmra.mxu0 %v137
  %v192 = vpop.f32.mrf.mxu0
  %v193 = vadd.f32 0.0, %v192
  %194 = vmatmul.f32.gmra.mxu0 %v140
  %v195 = vpop.f32.mrf.mxu0
  %v196 = vadd.f32 0.0, %v195
  %197 = vmatmul.f32.gmra.mxu0 %v143
  %v198 = vpop.f32.mrf.mxu0
  %v199 = vadd.f32 0.0, %v198
  %200 = vmatmul.f32.gmra.mxu0 %v146
  %v201 = vpop.f32.mrf.mxu0
  %v202 = vadd.f32 0.0, %v201
  %203 = vmatmul.f32.gmra.mxu0 %v149
  %v204 = vpop.f32.mrf.mxu0
  %v205 = vadd.f32 0.0, %v204
  %206 = vmatmul.f32.gmra.mxu0 %v152
  %v207 = vpop.f32.mrf.mxu0
  %v208 = vadd.f32 0.0, %v207
  %209 = vmatmul.f32.gmra.mxu0 %v155
  %v210 = vpop.f32.mrf.mxu0
  %v211 = vadd.f32 0.0, %v210
  %212 = vmatmul.f32.gmra.mxu0 %v158
  %v213 = vpop.f32.mrf.mxu0
  %v214 = vadd.f32 0.0, %v213
  %215 = vmatmul.f32.gmra.mxu0 %v161
  %v216 = vpop.f32.mrf.mxu0
  %v217 = vadd.f32 0.0, %v216
  %218 = vmatmul.f32.gmra.mxu0 %v164
  %v219 = vpop.f32.mrf.mxu0
  %v220 = vadd.f32 0.0, %v219
  %221 = vmatmul.f32.gmra.mxu0 %v167
  %v222 = vpop.f32.mrf.mxu0
  %v223 = vadd.f32 0.0, %v222
  %224 = vmatmul.f32.gmra.mxu0 %v170
  %v225 = vpop.f32.mrf.mxu0
  %v226 = vadd.f32 0.0, %v225
  %227 = vmatmul.f32.gmra.mxu0 %v173
  %v228 = vpop.f32.mrf.mxu0
  %v229 = vadd.f32 0.0, %v228
  %230 = vdwg.mxu0
  %231 = vst.msk [vmem:[%s3] sm:$0xff] %vm31, %v193
  %232 = vst.msk [vmem:[%s3 + $0x8] sm:$0xff] %vm31, %v196
  %233 = vst.msk [vmem:[%s3 + $0x10] sm:$0xff] %vm31, %v199
  %234 = vst.msk [vmem:[%s3 + $0x18] sm:$0xff] %vm31, %v202
  %235 = vst.msk [vmem:[%s3 + $0x20] sm:$0xff] %vm31, %v205
  %236 = vst.msk [vmem:[%s3 + $0x28] sm:$0xff] %vm31, %v208
  %237 = vst.msk [vmem:[%s3 + $0x30] sm:$0xff] %vm31, %v211
  %238 = vst.msk [vmem:[%s3 + $0x38] sm:$0xff] %vm31, %v214
  %239 = vst.msk [vmem:[%s3 + $0x40] sm:$0xff] %vm31, %v217
  %240 = vst.msk [vmem:[%s3 + $0x48] sm:$0xff] %vm31, %v220
  %241 = vst.msk [vmem:[%s3 + $0x50] sm:$0xff] %vm31, %v223
  %242 = vst.msk [vmem:[%s3 + $0x58] sm:$0xff] %vm31, %v226
  %243 = vst.msk [vmem:[%s3 + $0x60] sm:$0xff] %vm31, %v229
  // Predicated region
  $region14: #{_two_layer_linear_impl.1} parent=0 // pred_check
    _
  $region15: #{_two_layer_linear_impl.1} parent=0 // pred_check_branch
    %245 = sbr.rel (0) target = $region17
  $region16: #{_two_layer_linear_impl.1} parent=0 // pred_region
    _
  $region17: #{_two_layer_linear_impl.1} parent=0 // pred_fallthru
    _
  // Predicated region
  $region18: #{_two_layer_linear_impl.1} parent=0 // pred_check
    _
  $region19: #{_two_layer_linear_impl.1} parent=0 // pred_check_branch
    %247 = sbr.rel (0) target = $region21
  $region20: #{_two_layer_linear_impl.1} parent=0 // pred_region
    _
  $region21: #{_two_layer_linear_impl.1} parent=0 // pred_fallthru
    _

</llo_original>
